<compile_context>
chip_gen: v7x
topology: tpu7x:2x2x1
jax: 0.10.0
libtpu: 0.0.40
codegen_flags: <defaults>
</compile_context>

<pallas_src>
import functools

import jax
import jax.numpy as jnp
from jax.experimental import pallas as pl
from jax.experimental.pallas import tpu as pltpu

_LANES = 128
_SUBLANES = 8
_VREG_ELEMS = _SUBLANES * _LANES        # 1024 elements = one f32 vreg
_MAX_BLOCK_ROWS = 4096                  # 4096 x 128 f32 = 2 MiB per input buffer


def _round_up(x: int, m: int) -> int:
    return ((x + m - 1) // m) * m


def _cauchy_kernel(x_ref, out_ref, *, inv_eps, block_rows, steps, valid_rows,
                   need_mask):
    i = pl.program_id(1)               # reduction step within this split

    @pl.when(i == 0)
    def _():
        out_ref[...] = jnp.zeros_like(out_ref)

    # DMA stays in the input's native dtype; cast on the VPU.
    x = x_ref[...].astype(jnp.float32)

    if need_mask:
        # Partial last block: rows past the array are undefined -> zero them
        # (log(1 + 0) = 0, so they contribute nothing).
        s = pl.program_id(0)
        row0 = (s * steps + i) * block_rows
        rid = row0 + jax.lax.broadcasted_iota(jnp.int32, (block_rows, _LANES), 0)
        x = jnp.where(rid < valid_rows, x, 0.0)

    t = x * inv_eps
    vals = jnp.log(1.0 + t * t)
    # Fold (block_rows, 128) -> (8, 128) with pure VPU adds (no XLU), then
    # accumulate into the resident output block.
    out_ref[...] += vals.reshape(block_rows // _SUBLANES, _SUBLANES, _LANES).sum(axis=0)


def cauchy_loss(prob: jax.Array, epsilon: float) -> jax.Array:
    """Pallas TPU equivalent of CauchyLoss(epsilon)(prob). Returns a scalar."""
    n_elems = prob.size
    flat = prob.reshape(-1)

    padded = _round_up(n_elems, _VREG_ELEMS)
    if padded != n_elems:
        # Fallback copy only for non-(8*128)-aligned sizes (< 1024 pad zeros).
        flat = jnp.pad(flat, (0, padded - n_elems))
    rows = padded // _LANES                 # always a multiple of 8
    x2d = flat.reshape(rows, _LANES)

    block_rows = min(_MAX_BLOCK_ROWS, rows)             # multiple of 8
    total_blocks = pl.cdiv(rows, block_rows)
    need_mask = (rows % block_rows) != 0                # partial last block

    # Leading 'parallel' axis: two contiguous chunks of blocks so v7x can run
    # one chunk per TensorCore; harmless (size-1 or sequential) elsewhere.
    num_splits = 2 if (total_blocks >= 2 and total_blocks % 2 == 0) else 1
    steps = total_blocks // num_splits

    kernel = functools.partial(
        _cauchy_kernel,
        inv_eps=float(1.0 / epsilon),       # compile-time literals
        block_rows=block_rows,
        steps=steps,
        valid_rows=rows,
        need_mask=need_mask,
    )

    in_block_bytes = block_rows * _LANES * x2d.dtype.itemsize
    vmem_limit = int(max(16 << 20, 2 * in_block_bytes + (2 << 20)))

    partials = pl.pallas_call(
        kernel,
        out_shape=jax.ShapeDtypeStruct((num_splits * _SUBLANES, _LANES),
                                       jnp.float32),
        grid_spec=pltpu.PrefetchScalarGridSpec(
            num_scalar_prefetch=0,
            grid=(num_splits, steps),
            in_specs=[pl.BlockSpec((block_rows, _LANES),
                                   lambda s, i: (s * steps + i, 0))],
            out_specs=pl.BlockSpec((_SUBLANES, _LANES), lambda s, i: (s, 0)),
        ),
        compiler_params=pltpu.CompilerParams(
            dimension_semantics=("parallel", "arbitrary"),
            vmem_limit_bytes=vmem_limit,
        ),
    )(x2d)

    # One tiny XLA reduce over num_splits*8*128 partials + the mean scale.
    return jnp.sum(partials) / n_elems


if __name__ == "__main__":
    key = jax.random.PRNGKey(0)
    # "prob"-like input, NCHW-shaped as the surrounding model would produce.
    x = jax.random.uniform(key, (2, 4, 16, 16), dtype=jnp.float32)
    epsilon = 0.5

    loss = jax.block_until_ready(cauchy_loss(x, epsilon))

    # Pure-JAX reference check (same math as the PyTorch module).
    ref = jnp.mean(jnp.log(1.0 + (x / epsilon) ** 2))
    assert jnp.allclose(loss, ref, rtol=1e-5, atol=1e-6), (loss, ref)

    print("KERNEL_OK")
</pallas_src>

<mosaic_0001>
module attributes {stable_mosaic.version = 11 : i64} {
  func.func @_cauchy_kernel(%arg0: i32, %arg1: i32, %arg2: memref<16x128xf32, #tpu.memory_space<vmem>>, %arg3: memref<8x128xf32, #tpu.memory_space<vmem>>) attributes {dimension_semantics = [#tpu.dimension_semantics<parallel>, #tpu.dimension_semantics<arbitrary>], iteration_bounds = array<i64: 1, 1>, scalar_prefetch = 0 : i64, scratch_operands = 0 : i64, tpu.core_type = #tpu.core_type<tc>, window_params = [{transform_indices = @transform_0, window_bounds = array<i64: 16, 128>}, {transform_indices = @transform_1, window_bounds = array<i64: 8, 128>}]} {
    %c0_i32 = arith.constant 0 : i32
    %0 = arith.cmpi eq, %arg1, %c0_i32 : i32
    %1 = arith.extui %0 : i1 to i32
    %c0_i32_0 = arith.constant 0 : i32
    %2 = arith.cmpi ne, %1, %c0_i32_0 : i32
    scf.if %2 {
      %cst_8 = arith.constant 0.000000e+00 : f32
      %15 = vector.broadcast %cst_8 : f32 to vector<8x128xf32>
      %c0_9 = arith.constant 0 : index
      %c0_10 = arith.constant 0 : index
      %16 = vector.load %arg3[%c0_9, %c0_10] : memref<8x128xf32, #tpu.memory_space<vmem>>, vector<8x128xf32>
      tpu.vector_store %arg3[%c0_9, %c0_10], %15 {strides = array<i32>} : memref<8x128xf32, #tpu.memory_space<vmem>>, vector<8x128xf32>,
    } else {
    }
    %c0 = arith.constant 0 : index
    %c0_1 = arith.constant 0 : index
    %3 = vector.load %arg2[%c0, %c0_1] : memref<16x128xf32, #tpu.memory_space<vmem>>, vector<16x128xf32>
    %cst = arith.constant 2.000000e+00 : f32
    %4 = vector.broadcast %cst : f32 to vector<16x128xf32>
    %5 = arith.mulf %3, %4 : vector<16x128xf32>
    %6 = arith.mulf %5, %5 : vector<16x128xf32>
    %cst_2 = arith.constant 1.000000e+00 : f32
    %7 = vector.broadcast %cst_2 : f32 to vector<16x128xf32>
    %8 = arith.addf %7, %6 : vector<16x128xf32>
    %9 = math.log %8 : vector<16x128xf32>
    %c0_3 = arith.constant 0 : index
    %c0_4 = arith.constant 0 : index
    %10 = vector.load %arg3[%c0_3, %c0_4] : memref<8x128xf32, #tpu.memory_space<vmem>>, vector<8x128xf32>
    %11 = vector.shape_cast %9 : vector<16x128xf32> to vector<2x8x128xf32>
    %cst_5 = arith.constant dense<0.000000e+00> : vector<8x128xf32>
    %12 = vector.multi_reduction <add>, %11, %cst_5 [0] : vector<2x8x128xf32> to vector<8x128xf32>
    %13 = arith.addf %10, %12 : vector<8x128xf32>
    %c0_6 = arith.constant 0 : index
    %c0_7 = arith.constant 0 : index
    %14 = vector.load %arg3[%c0_6, %c0_7] : memref<8x128xf32, #tpu.memory_space<vmem>>, vector<8x128xf32>
    tpu.vector_store %arg3[%c0_6, %c0_7], %13 {strides = array<i32>} : memref<8x128xf32, #tpu.memory_space<vmem>>, vector<8x128xf32>,
    return
  }
  func.func @transform_0(%arg0: i32, %arg1: i32) -> (i32, i32) {
    %c1_i32 = arith.constant 1 : i32
    %0 = arith.muli %arg0, %c1_i32 : i32
    %1 = arith.addi %0, %arg1 : i32
    %c0_i32 = arith.constant 0 : i32
    %c0_i32_0 = arith.constant 0 : i32
    return %1, %c0_i32 : i32, i32
  }
  func.func @transform_1(%arg0: i32, %arg1: i32) -> (i32, i32) {
    %c0_i32 = arith.constant 0 : i32
    %c0_i32_0 = arith.constant 0 : i32
    return %arg0, %c0_i32 : i32, i32
  }
}

</mosaic_0001>

<llo_original>
// kernel: tpu_custom_call.1
$region0: #{tpu_custom_call.1}
  #allocation0 [shape = 'u32[]', space=smem, size = 0x4, offset = 0x4, fixed_abs, tag = 'smem constant byte address 0x4 - core index']
  #allocation1 [shape = 'u32[144,128]{1,0:T(1,128)}', space=vmem, size = 0x12000, scoped, tag = 'internal scratch']
  %s0 = inlined_call_operand.hbm [shape: f32[16,128], index: 0, kind: input, shape index: {}]
  %s1 = inlined_call_operand.hbm [shape: f32[8,128], index: 1, kind: output, shape index: {}]
  %s2 = sld [smem:[#allocation0]]
  $region22: #{tpu_custom_call.1} parent=0
    _
  %s4 = ssub.s32 1, %s2
  %s5 = scalar_select 0, %s4, %s2
  $region1: #{tpu_custom_call.1} parent=0
    #allocation2 [shape = 'u8[8192]{0}', space=vmem, size = 0x2000, scoped, tag = 'input window, operand 0, single buffered']
    #allocation3 [shape = 's32[1]{0}', space=sflag, size = 0x4, scoped, tag = 'scoped memory for tpu_custom_call.1']
    #allocation4 [shape = 's32[1]{0}', space=sflag, size = 0x4, scoped, tag = 'scoped memory for tpu_custom_call.1']
    #allocation5 [shape = 'u8[4096]{0}', space=vmem, size = 0x1000, scoped, tag = 'output window, operand 0, single buffered']
    %6 = vsyncpa [#allocation3], 0
    %7 = vsyncpa [#allocation4], 0
    // Predicated region
    $region2: #{tpu_custom_call.1} parent=1 // pred_check
      _
    $region3: #{tpu_custom_call.1} parent=1 // pred_check_branch
      %9 = sbr.rel (0) target = $region5
    $region4: #{tpu_custom_call.1} parent=1 // pred_region
      %s10 = sadd.s32 0, 0
      %s11 = smul.u32 2, %s10
      %s13 = ssub.s32 256, 256
      %14 = vsyncadd [#allocation3], %s13
      %s15 = smul.addr %s11, 128
      %s16 = scalar_lea.hbm %s0, %s15
      %s17 = sshll.u32 [#allocation2], 4
      %s18 = int_to_ptr.vmem [resolvable:$true] %s17
      %23 = dma.hbm_to_vmem [thread:$0]  %s16, 256, %s18, [#allocation3], 128, 128, 8
    $region5: #{tpu_custom_call.1} parent=1 // pred_fallthru
      _
    // Predicated region
    $region6: #{tpu_custom_call.1} parent=1 // pred_check
      _
    $region7: #{tpu_custom_call.1} parent=1 // pred_check_branch
      %25 = sbr.rel (0) target = $region9
    $region8: #{tpu_custom_call.1} parent=1 // pred_region
      %26 = dma.done [#allocation3], 256
    $region9: #{tpu_custom_call.1} parent=1 // pred_fallthru
      _
    %s27 = sadd.s32 0, 0
    %s28 = smul.u32 2, %s27
    %p29 = scmp.eq.s32.totalorder 0, 0
    // Predicated region
    $region10: #{tpu_custom_call.1} parent=1 // pred_check
      %p30 = pneg %p29
    $region11: #{tpu_custom_call.1} parent=1 // pred_check_branch
      %32 = sbr.rel (%p30) target = $region13
    $region12: #{tpu_custom_call.1} parent=1 // pred_region
      %33 = vst [vmem:[#allocation5] sm:$0xff] 0.0
    $region13: #{tpu_custom_call.1} parent=1 // pred_fallthru
      _
    %v34 = vld [vmem:[#allocation2] sm:$0xff]
    %v35 = vld [vmem:[#allocation2 + $0x8] sm:$0xff]
    %v36 = vmul.f32 %v34, 2.0
    %v37 = vmul.f32 %v35, 2.0
    %v38 = vmul.f32 %v36, %v36
    %v39 = vmul.f32 %v37, %v37
    %v40 = vadd.f32 %v38, 1.0
    %v41 = vadd.f32 %v39, 1.0
    %v42 = vlog2.pop %v40
    %v43 = vmul.f32 %v42, 0.6931472
    %v44 = vlog2.pop %v41
    %v45 = vmul.f32 %v44, 0.6931472
    %v46 = vld [vmem:[#allocation5] sm:$0xff]
    %v47 = vadd.f32 %v43, %v45
    %v48 = vadd.f32 %v46, %v47
    %49 = vst [vmem:[#allocation5] sm:$0xff] %v48
    // Predicated region
    $region14: #{tpu_custom_call.1} parent=1 // pred_check
      _
    $region15: #{tpu_custom_call.1} parent=1 // pred_check_branch
      %51 = sbr.rel (0) target = $region17
    $region16: #{tpu_custom_call.1} parent=1 // pred_region
      %s53 = ssub.s32 128, 128
      %54 = vsyncadd [#allocation4], %s53
      %s56 = sshll.u32 [#allocation5], 4
      %s57 = int_to_ptr.vmem [resolvable:$true] %s56
      %59 = dma.vmem_to_hbm [thread:$0]  %s57, 128, %s1, [#allocation4]
    $region17: #{tpu_custom_call.1} parent=1 // pred_fallthru
      _
    // Predicated region
    $region18: #{tpu_custom_call.1} parent=1 // pred_check
      _
    $region19: #{tpu_custom_call.1} parent=1 // pred_check_branch
      %61 = sbr.rel (0) target = $region21
    $region20: #{tpu_custom_call.1} parent=1 // pred_region
      %62 = dma.done [#allocation4], 128
    $region21: #{tpu_custom_call.1} parent=1 // pred_fallthru
      _
    %63 = vsyncpa [#allocation3], 1
    %64 = vsyncpa [#allocation4], 1

</llo_original>
